<compile_context>
chip_gen: v5e
topology: v5e:2x2
jax: 0.10.0
libtpu: 0.0.40
codegen_flags: <defaults>
</compile_context>

<pallas_src>
import jax
import jax.numpy as jnp
from jax import lax
from jax.experimental import pallas as pl
from jax.experimental.pallas import tpu as pltpu

# ---- model hyper-parameters (latent_size=8, img_size=128 -> plan 8 -> 16 -> 32 -> 64 -> 128) ----
B = 8                     # batch size of one forward() call
LATENT = 8                # latent_size
IMG = 128                 # img_size
H1, H2, H3 = 16, 32, 64   # feature-extractor widths: 8 -> 16 -> 32 -> 64
FW = 128                  # zero-padded lane width used throughout the kernel (full vreg lanes)
MBD_OUT = 16              # mbd_out_features
MBD_K = 8                 # mbd_kernel_dim
EPS = 1e-5                # BatchNorm1d eps
NEG_SLOPE = 0.2           # LeakyReLU negative slope
THRESH = 0.5              # BinaryStraightThrough threshold

# ---- row offsets inside the single packed parameter slab (SLAB_ROWS, 128), f32 ----
R_W1 = 0                       # (LATENT, 128): w1 in cols 0:H1
R_W2 = R_W1 + LATENT           # (128, 128):   w2 in [0:H1, 0:H2], rest zero
R_W3 = R_W2 + FW               # (128, 128):   w3 in [0:H2, 0:H3], rest zero
R_T = R_W3 + FW                # (128, 128):   T.view(H3, O*K) in rows 0:H3, rest zero
R_WFF = R_T + FW               # (128, 128):   final weight (feature rows) in rows 0:H3, rest zero
R_WFM = R_WFF + FW             # (MBD_OUT, 128): final weight (mbd rows)
R_VEC = R_WFM + MBD_OUT        # (16, 128):    b1,g1,be1,b2,g2,be2,b3,g3,be3,bf (one per row)
R_G = R_VEC + 16               # (O*K, 16 @ lane 0): kernel-dim grouping matrix
R_EF = R_G + MBD_OUT * MBD_K   # (B*B,  8 @ lane 0): (+1 at i, -1 at j) pair matrix
R_R = R_EF + B * B             # (B,   64 @ lane 0): sum-over-j reduction matrix
SLAB_ROWS = R_R + B            # = 752 rows  (~376 KiB f32)

FLOPS_PER_STEP = 1_245_184     # sum of the 9 tiny matmuls
TRANS_PER_STEP = 1_408         # exp (64*16) + rsqrt (3*128)


def generator_sigmoid_stembd_kernel(x_ref, slab_ref, out_ref):
    x = x_ref[...]                                                  # (B, LATENT)

    def fdot(a, b):                                                 # exact f32 matmul (tiny K)
        return jnp.dot(a, b, preferred_element_type=jnp.float32)

    def bdot(a, b):                                                 # bf16-operand MXU matmul, f32 acc
        return jnp.dot(a.astype(jnp.bfloat16), b.astype(jnp.bfloat16),
                       preferred_element_type=jnp.float32)

    def leaky_bn(h, v):
        # rows v, v+1, v+2 of the vector band = bias, gamma, beta; padded lanes hold zeros,
        # which keeps padded activation lanes exactly zero through the whole extractor.
        bias = slab_ref[v:v + 1, :]
        gamma = slab_ref[v + 1:v + 2, :]
        beta = slab_ref[v + 2:v + 3, :]
        h = h + bias
        h = jnp.maximum(h, NEG_SLOPE * h)                           # LeakyReLU(0.2)
        mean = jnp.mean(h, axis=0, keepdims=True)                   # batch statistics (training mode)
        d = h - mean
        var = jnp.mean(d * d, axis=0, keepdims=True)                # two-pass variance
        return d * (gamma * lax.rsqrt(var + EPS)) + beta

    # ---- feature extractor: 3 x [Linear -> LeakyReLU -> BatchNorm1d] on 128-lane tiles ----
    h = fdot(x, slab_ref[R_W1:R_W1 + LATENT, :])                    # (B, 128), K=8 stays f32
    h = leaky_bn(h, R_VEC + 0)
    h = bdot(h, slab_ref[R_W2:R_W2 + FW, :])
    h = leaky_bn(h, R_VEC + 3)
    h = bdot(h, slab_ref[R_W3:R_W3 + FW, :])
    h = leaky_bn(h, R_VEC + 6)                                      # lanes 0:H3 real, rest exactly 0

    # ---- MiniBatchDiscrimination (fully batched; host-hoisted constants, all at lane 0) ----
    M = bdot(h, slab_ref[R_T:R_T + FW, :])                          # (B, O*K)
    EF = slab_ref[R_EF:R_EF + B * B, 0:B]                           # (B*B, B)
    D = jnp.abs(fdot(EF, M))                                        # (B*B, O*K) pairwise |M_i - M_j|
    G = slab_ref[R_G:R_G + MBD_OUT * MBD_K, 0:MBD_OUT]              # (O*K, O)
    L = bdot(D, G)                                                  # (B*B, O)  L1 over kernel dim
    c = jnp.exp(-L)                                                 # one EUP launch
    Rm = slab_ref[R_R:R_R + B, 0:B * B]                             # (B, B*B)
    mbd = fdot(Rm, c) - 1.0                                         # (B, O)    drop the self pair

    # ---- new_final_layer Linear -> Sigmoid -> BinaryStraightThrough(0.5) ----
    logits = (bdot(h, slab_ref[R_WFF:R_WFF + FW, :])
              + fdot(mbd, slab_ref[R_WFM:R_WFM + MBD_OUT, :])
              + slab_ref[R_VEC + 9:R_VEC + 10, :])                  # (B, IMG)
    # sigmoid(x) > 0.5  <=>  x > 0 : exact, skips the exp + divide on the critical path.
    out_ref[...] = (logits > 0.0).astype(out_ref.dtype)


def generator_sigmoid_stembd(x, slab):
    """x: (B, LATENT) for one forward() call, or (N, B, LATENT) for N independent calls."""
    squeeze = x.ndim == 2
    if squeeze:
        x = x[None]
    n = x.shape[0]
    assert x.shape[1:] == (B, LATENT)

    cost = pl.CostEstimate(
        flops=n * FLOPS_PER_STEP,
        transcendentals=n * TRANS_PER_STEP,
        bytes_accessed=SLAB_ROWS * IMG * 4 + n * (B * LATENT + B * IMG) * 4,
    )
    out = pl.pallas_call(
        generator_sigmoid_stembd_kernel,
        out_shape=jax.ShapeDtypeStruct((n, B, IMG), jnp.float32),
        grid_spec=pltpu.PrefetchScalarGridSpec(
            num_scalar_prefetch=0,
            grid=(n,),
            in_specs=[
                pl.BlockSpec((None, B, LATENT), lambda i: (i, 0, 0)),     # per-step x tile
                pl.BlockSpec((SLAB_ROWS, IMG), lambda i: (0, 0)),         # slab resident across grid
            ],
            out_specs=pl.BlockSpec((None, B, IMG), lambda i: (i, 0, 0)),
        ),
        compiler_params=pltpu.CompilerParams(
            dimension_semantics=("parallel",),   # v7x: split micro-batches across the 2 TensorCores
        ),
        cost_estimate=cost,
    )(x, slab)
    return out[0] if squeeze else out


# ----------------------------- host-side parameter handling -----------------------------
def init_params(key):
    """Deterministic synthetic parameters matching the PyTorch module's shapes."""
    ks = jax.random.split(key, 6)

    def linear(k, fin, fout):
        kw, kb = jax.random.split(k)
        bound = 1.0 / jnp.sqrt(jnp.float32(fin))
        w = jax.random.uniform(kw, (fin, fout), jnp.float32, -bound, bound)
        b = jax.random.uniform(kb, (1, fout), jnp.float32, -bound, bound)
        return w, b

    p = {}
    p["w1"], p["b1"] = linear(ks[0], LATENT, H1)
    p["w2"], p["b2"] = linear(ks[1], H1, H2)
    p["w3"], p["b3"] = linear(ks[2], H2, H3)
    # BatchNorm1d affine params (PyTorch default init: gamma=1, beta=0)
    p["g1"], p["be1"] = jnp.ones((1, H1), jnp.float32), jnp.zeros((1, H1), jnp.float32)
    p["g2"], p["be2"] = jnp.ones((1, H2), jnp.float32), jnp.zeros((1, H2), jnp.float32)
    p["g3"], p["be3"] = jnp.ones((1, H3), jnp.float32), jnp.zeros((1, H3), jnp.float32)
    # MiniBatchDiscrimination T: (in_features, out_features, kernel_dim), flattened like T.view(F, -1)
    t = jax.random.normal(ks[3], (H3, MBD_OUT, MBD_K), jnp.float32)
    p["t_flat"] = t.reshape(H3, MBD_OUT * MBD_K)
    # new_final_layer Linear(H3 + MBD_OUT, IMG): stored as (in, out) = W^T, rows = [features | mbd]
    p["wf"], p["bf"] = linear(ks[4], H3 + MBD_OUT, IMG)
    return p


def pack_params(p):
    """Pack the 16 parameter tensors + hoisted MBD constants into ONE 128-lane slab."""
    slab = jnp.zeros((SLAB_ROWS, IMG), jnp.float32)
    # feature-extractor / T / final-layer weights (zero-padded to 128-lane MXU tiles)
    slab = slab.at[R_W1:R_W1 + LATENT, 0:H1].set(p["w1"])
    slab = slab.at[R_W2:R_W2 + H1, 0:H2].set(p["w2"])
    slab = slab.at[R_W3:R_W3 + H2, 0:H3].set(p["w3"])
    slab = slab.at[R_T:R_T + H3, :].set(p["t_flat"])
    slab = slab.at[R_WFF:R_WFF + H3, :].set(p["wf"][:H3])
    slab = slab.at[R_WFM:R_WFM + MBD_OUT, :].set(p["wf"][H3:])
    # per-feature vectors, one per row, zero-padded to 128 lanes
    vec_rows = [("b1", H1), ("g1", H1), ("be1", H1),
                ("b2", H2), ("g2", H2), ("be2", H2),
                ("b3", H3), ("g3", H3), ("be3", H3)]
    for row, (name, width) in enumerate(vec_rows):
        slab = slab.at[R_VEC + row, 0:width].set(p[name][0])
    slab = slab.at[R_VEC + 9, :].set(p["bf"][0])
    # MBD constants, hoisted out of the kernel; each band starts at lane 0
    pk = jnp.arange(MBD_OUT * MBD_K) // MBD_K
    G = (pk[:, None] == jnp.arange(MBD_OUT)[None, :]).astype(jnp.float32)            # (O*K, O)
    pr = jnp.arange(B * B)
    cols = jnp.arange(B)
    EF = ((pr[:, None] // B == cols[None, :]).astype(jnp.float32)
          - (pr[:, None] % B == cols[None, :]).astype(jnp.float32))                  # (B*B, B)
    Rm = (pr[None, :] // B == cols[:, None]).astype(jnp.float32)                     # (B, B*B)
    slab = slab.at[R_G:R_G + MBD_OUT * MBD_K, 0:MBD_OUT].set(G)
    slab = slab.at[R_EF:R_EF + B * B, 0:B].set(EF)
    slab = slab.at[R_R:R_R + B, 0:B * B].set(Rm)
    return slab


# ------------------- pure-JAX reference (mirrors the PyTorch module, f32) -------------------
def reference_forward(x, p):
    def layer(h, w, b, g, be):
        h = jnp.dot(h, w) + b
        h = jnp.where(h > 0, h, NEG_SLOPE * h)
        mean = jnp.mean(h, axis=0, keepdims=True)
        var = jnp.mean((h - mean) ** 2, axis=0, keepdims=True)
        return (h - mean) / jnp.sqrt(var + EPS) * g + be

    h = layer(x, p["w1"], p["b1"], p["g1"], p["be1"])
    h = layer(h, p["w2"], p["b2"], p["g2"], p["be2"])
    h = layer(h, p["w3"], p["b3"], p["g3"], p["be3"])
    M = jnp.dot(h, p["t_flat"]).reshape(B, MBD_OUT, MBD_K)
    diff = jnp.abs(M[:, None, :, :] - M[None, :, :, :]).sum(-1)      # (B, B, O)
    mbd = jnp.exp(-diff).sum(axis=1) - 1.0                           # (B, O)
    logits = jnp.concatenate([h, mbd], axis=1) @ p["wf"] + p["bf"]
    s = jax.nn.sigmoid(logits)
    binary = jnp.where(s > THRESH, 1.0, 0.0)
    return binary, logits


if __name__ == "__main__":
    key = jax.random.PRNGKey(0)
    kx, kp = jax.random.split(key)
    N_MB = 2                                     # two independent forward() calls in one launch
    x = jax.random.normal(kx, (N_MB, B, LATENT), jnp.float32)
    params = init_params(kp)
    slab = pack_params(params)

    out = generator_sigmoid_stembd(x, slab)
    jax.block_until_ready(out)

    assert out.shape == (N_MB, B, IMG)
    assert bool(jnp.all(jnp.isfinite(out)))
    # BinaryStraightThrough forward produces exact 0/1 values
    assert bool(jnp.all((out == 0.0) | (out == 1.0)))

    # Cross-check against a pure-JAX f32 reference. bf16 MXU operands can only flip outputs whose
    # logits sit essentially on the decision boundary, so require exact agreement away from it.
    total_mismatch = 0
    for n in range(N_MB):
        ref_bin, ref_logits = reference_forward(x[n], params)
        confident = jnp.abs(ref_logits) > 0.1
        agree = bool(jnp.all(jnp.where(confident, out[n] == ref_bin, True)))
        assert agree, "kernel disagrees with reference away from the decision boundary"
        total_mismatch += int(jnp.sum(out[n] != ref_bin))
    assert total_mismatch <= (N_MB * B * IMG) // 20, \
        f"too many boundary flips vs reference: {total_mismatch}/{N_MB * B * IMG}"

    print("KERNEL_OK")
</pallas_src>

<mosaic_0001>
module attributes {stable_mosaic.version = 11 : i64} {
  func.func @generator_sigmoid_stembd_kernel(%arg0: i32, %arg1: memref<1x8x8xf32, #tpu.memory_space<vmem>>, %arg2: memref<752x128xf32, #tpu.memory_space<vmem>>, %arg3: memref<1x8x128xf32, #tpu.memory_space<vmem>>) attributes {dimension_semantics = [#tpu.dimension_semantics<parallel>], iteration_bounds = array<i64: 2>, scalar_prefetch = 0 : i64, scratch_operands = 0 : i64, tpu.core_type = #tpu.core_type<tc>, window_params = [{transform_indices = @transform_0, window_bounds = array<i64: 1, 8, 8>}, {pipeline_mode = #tpu.pipeline_mode<synchronous>, transform_indices = @transform_1, window_bounds = array<i64: 752, 128>}, {transform_indices = @transform_2, window_bounds = array<i64: 1, 8, 128>}]} {
    %c0 = arith.constant 0 : index
    %c0_0 = arith.constant 0 : index
    %c0_1 = arith.constant 0 : index
    %0 = vector.load %arg1[%c0, %c0_0, %c0_1] : memref<1x8x8xf32, #tpu.memory_space<vmem>>, vector<1x8x8xf32>
    %1 = vector.shape_cast %0 : vector<1x8x8xf32> to vector<8x8xf32>
    %c0_2 = arith.constant 0 : index
    %c0_3 = arith.constant 0 : index
    %2 = vector.load %arg2[%c0_2, %c0_3] : memref<752x128xf32, #tpu.memory_space<vmem>>, vector<8x128xf32>
    %cst = arith.constant dense<0.000000e+00> : vector<8x128xf32>
    %3 = tpu.matmul %1, %2, %cst {dimension_numbers = #tpu.dot_dimension_numbers<[1], [0], [0], [1], [0, 0, 1, 1], [], []>} : vector<8x8xf32>, vector<8x128xf32>, vector<8x128xf32> -> vector<8x128xf32>
    %c536 = arith.constant 536 : index
    %c0_4 = arith.constant 0 : index
    %4 = vector.load %arg2[%c536, %c0_4] : memref<752x128xf32, #tpu.memory_space<vmem>>, vector<1x128xf32>
    %c537 = arith.constant 537 : index
    %c0_5 = arith.constant 0 : index
    %5 = vector.load %arg2[%c537, %c0_5] : memref<752x128xf32, #tpu.memory_space<vmem>>, vector<1x128xf32>
    %c538 = arith.constant 538 : index
    %c0_6 = arith.constant 0 : index
    %6 = vector.load %arg2[%c538, %c0_6] : memref<752x128xf32, #tpu.memory_space<vmem>>, vector<1x128xf32>
    %7 = vector.broadcast %4 : vector<1x128xf32> to vector<8x128xf32>
    %8 = arith.addf %3, %7 : vector<8x128xf32>
    %cst_7 = arith.constant 2.000000e-01 : f32
    %9 = vector.broadcast %cst_7 : f32 to vector<8x128xf32>
    %10 = arith.mulf %9, %8 : vector<8x128xf32>
    %11 = arith.maximumf %8, %10 : vector<8x128xf32>
    %cst_8 = arith.constant dense<0.000000e+00> : vector<128xf32>
    %12 = vector.multi_reduction <add>, %11, %cst_8 [0] : vector<8x128xf32> to vector<128xf32>
    %13 = vector.shape_cast %12 : vector<128xf32> to vector<1x128xf32>
    %cst_9 = arith.constant 8.000000e+00 : f32
    %14 = vector.broadcast %cst_9 : f32 to vector<1x128xf32>
    %15 = arith.divf %13, %14 : vector<1x128xf32>
    %16 = vector.broadcast %15 : vector<1x128xf32> to vector<8x128xf32>
    %17 = arith.subf %11, %16 : vector<8x128xf32>
    %18 = arith.mulf %17, %17 : vector<8x128xf32>
    %cst_10 = arith.constant dense<0.000000e+00> : vector<128xf32>
    %19 = vector.multi_reduction <add>, %18, %cst_10 [0] : vector<8x128xf32> to vector<128xf32>
    %20 = vector.shape_cast %19 : vector<128xf32> to vector<1x128xf32>
    %cst_11 = arith.constant 8.000000e+00 : f32
    %21 = vector.broadcast %cst_11 : f32 to vector<1x128xf32>
    %22 = arith.divf %20, %21 : vector<1x128xf32>
    %cst_12 = arith.constant 9.99999974E-6 : f32
    %23 = vector.broadcast %cst_12 : f32 to vector<1x128xf32>
    %24 = arith.addf %22, %23 : vector<1x128xf32>
    %25 = math.rsqrt %24 : vector<1x128xf32>
    %26 = arith.mulf %5, %25 : vector<1x128xf32>
    %27 = vector.broadcast %26 : vector<1x128xf32> to vector<8x128xf32>
    %28 = arith.mulf %17, %27 : vector<8x128xf32>
    %29 = vector.broadcast %6 : vector<1x128xf32> to vector<8x128xf32>
    %30 = arith.addf %28, %29 : vector<8x128xf32>
    %c8 = arith.constant 8 : index
    %c0_13 = arith.constant 0 : index
    %31 = vector.load %arg2[%c8, %c0_13] : memref<752x128xf32, #tpu.memory_space<vmem>>, vector<128x128xf32>
    %32 = arith.truncf %30 : vector<8x128xf32> to vector<8x128xbf16>
    %33 = arith.truncf %31 : vector<128x128xf32> to vector<128x128xbf16>
    %cst_14 = arith.constant dense<0.000000e+00> : vector<8x128xf32>
    %34 = tpu.matmul %32, %33, %cst_14 {dimension_numbers = #tpu.dot_dimension_numbers<[1], [0], [0], [1], [0, 0, 1, 1], [], []>} : vector<8x128xbf16>, vector<128x128xbf16>, vector<8x128xf32> -> vector<8x128xf32>
    %c539 = arith.constant 539 : index
    %c0_15 = arith.constant 0 : index
    %35 = vector.load %arg2[%c539, %c0_15] : memref<752x128xf32, #tpu.memory_space<vmem>>, vector<1x128xf32>
    %c540 = arith.constant 540 : index
    %c0_16 = arith.constant 0 : index
    %36 = vector.load %arg2[%c540, %c0_16] : memref<752x128xf32, #tpu.memory_space<vmem>>, vector<1x128xf32>
    %c541 = arith.constant 541 : index
    %c0_17 = arith.constant 0 : index
    %37 = vector.load %arg2[%c541, %c0_17] : memref<752x128xf32, #tpu.memory_space<vmem>>, vector<1x128xf32>
    %38 = vector.broadcast %35 : vector<1x128xf32> to vector<8x128xf32>
    %39 = arith.addf %34, %38 : vector<8x128xf32>
    %cst_18 = arith.constant 2.000000e-01 : f32
    %40 = vector.broadcast %cst_18 : f32 to vector<8x128xf32>
    %41 = arith.mulf %40, %39 : vector<8x128xf32>
    %42 = arith.maximumf %39, %41 : vector<8x128xf32>
    %cst_19 = arith.constant dense<0.000000e+00> : vector<128xf32>
    %43 = vector.multi_reduction <add>, %42, %cst_19 [0] : vector<8x128xf32> to vector<128xf32>
    %44 = vector.shape_cast %43 : vector<128xf32> to vector<1x128xf32>
    %cst_20 = arith.constant 8.000000e+00 : f32
    %45 = vector.broadcast %cst_20 : f32 to vector<1x128xf32>
    %46 = arith.divf %44, %45 : vector<1x128xf32>
    %47 = vector.broadcast %46 : vector<1x128xf32> to vector<8x128xf32>
    %48 = arith.subf %42, %47 : vector<8x128xf32>
    %49 = arith.mulf %48, %48 : vector<8x128xf32>
    %cst_21 = arith.constant dense<0.000000e+00> : vector<128xf32>
    %50 = vector.multi_reduction <add>, %49, %cst_21 [0] : vector<8x128xf32> to vector<128xf32>
    %51 = vector.shape_cast %50 : vector<128xf32> to vector<1x128xf32>
    %cst_22 = arith.constant 8.000000e+00 : f32
    %52 = vector.broadcast %cst_22 : f32 to vector<1x128xf32>
    %53 = arith.divf %51, %52 : vector<1x128xf32>
    %cst_23 = arith.constant 9.99999974E-6 : f32
    %54 = vector.broadcast %cst_23 : f32 to vector<1x128xf32>
    %55 = arith.addf %53, %54 : vector<1x128xf32>
    %56 = math.rsqrt %55 : vector<1x128xf32>
    %57 = arith.mulf %36, %56 : vector<1x128xf32>
    %58 = vector.broadcast %57 : vector<1x128xf32> to vector<8x128xf32>
    %59 = arith.mulf %48, %58 : vector<8x128xf32>
    %60 = vector.broadcast %37 : vector<1x128xf32> to vector<8x128xf32>
    %61 = arith.addf %59, %60 : vector<8x128xf32>
    %c136 = arith.constant 136 : index
    %c0_24 = arith.constant 0 : index
    %62 = vector.load %arg2[%c136, %c0_24] : memref<752x128xf32, #tpu.memory_space<vmem>>, vector<128x128xf32>
    %63 = arith.truncf %61 : vector<8x128xf32> to vector<8x128xbf16>
    %64 = arith.truncf %62 : vector<128x128xf32> to vector<128x128xbf16>
    %cst_25 = arith.constant dense<0.000000e+00> : vector<8x128xf32>
    %65 = tpu.matmul %63, %64, %cst_25 {dimension_numbers = #tpu.dot_dimension_numbers<[1], [0], [0], [1], [0, 0, 1, 1], [], []>} : vector<8x128xbf16>, vector<128x128xbf16>, vector<8x128xf32> -> vector<8x128xf32>
    %c542 = arith.constant 542 : index
    %c0_26 = arith.constant 0 : index
    %66 = vector.load %arg2[%c542, %c0_26] : memref<752x128xf32, #tpu.memory_space<vmem>>, vector<1x128xf32>
    %c543 = arith.constant 543 : index
    %c0_27 = arith.constant 0 : index
    %67 = vector.load %arg2[%c543, %c0_27] : memref<752x128xf32, #tpu.memory_space<vmem>>, vector<1x128xf32>
    %c544 = arith.constant 544 : index
    %c0_28 = arith.constant 0 : index
    %68 = vector.load %arg2[%c544, %c0_28] : memref<752x128xf32, #tpu.memory_space<vmem>>, vector<1x128xf32>
    %69 = vector.broadcast %66 : vector<1x128xf32> to vector<8x128xf32>
    %70 = arith.addf %65, %69 : vector<8x128xf32>
    %cst_29 = arith.constant 2.000000e-01 : f32
    %71 = vector.broadcast %cst_29 : f32 to vector<8x128xf32>
    %72 = arith.mulf %71, %70 : vector<8x128xf32>
    %73 = arith.maximumf %70, %72 : vector<8x128xf32>
    %cst_30 = arith.constant dense<0.000000e+00> : vector<128xf32>
    %74 = vector.multi_reduction <add>, %73, %cst_30 [0] : vector<8x128xf32> to vector<128xf32>
    %75 = vector.shape_cast %74 : vector<128xf32> to vector<1x128xf32>
    %cst_31 = arith.constant 8.000000e+00 : f32
    %76 = vector.broadcast %cst_31 : f32 to vector<1x128xf32>
    %77 = arith.divf %75, %76 : vector<1x128xf32>
    %78 = vector.broadcast %77 : vector<1x128xf32> to vector<8x128xf32>
    %79 = arith.subf %73, %78 : vector<8x128xf32>
    %80 = arith.mulf %79, %79 : vector<8x128xf32>
    %cst_32 = arith.constant dense<0.000000e+00> : vector<128xf32>
    %81 = vector.multi_reduction <add>, %80, %cst_32 [0] : vector<8x128xf32> to vector<128xf32>
    %82 = vector.shape_cast %81 : vector<128xf32> to vector<1x128xf32>
    %cst_33 = arith.constant 8.000000e+00 : f32
    %83 = vector.broadcast %cst_33 : f32 to vector<1x128xf32>
    %84 = arith.divf %82, %83 : vector<1x128xf32>
    %cst_34 = arith.constant 9.99999974E-6 : f32
    %85 = vector.broadcast %cst_34 : f32 to vector<1x128xf32>
    %86 = arith.addf %84, %85 : vector<1x128xf32>
    %87 = math.rsqrt %86 : vector<1x128xf32>
    %88 = arith.mulf %67, %87 : vector<1x128xf32>
    %89 = vector.broadcast %88 : vector<1x128xf32> to vector<8x128xf32>
    %90 = arith.mulf %79, %89 : vector<8x128xf32>
    %91 = vector.broadcast %68 : vector<1x128xf32> to vector<8x128xf32>
    %92 = arith.addf %90, %91 : vector<8x128xf32>
    %c264 = arith.constant 264 : index
    %c0_35 = arith.constant 0 : index
    %93 = vector.load %arg2[%c264, %c0_35] : memref<752x128xf32, #tpu.memory_space<vmem>>, vector<128x128xf32>
    %94 = arith.truncf %92 : vector<8x128xf32> to vector<8x128xbf16>
    %95 = arith.truncf %93 : vector<128x128xf32> to vector<128x128xbf16>
    %cst_36 = arith.constant dense<0.000000e+00> : vector<8x128xf32>
    %96 = tpu.matmul %94, %95, %cst_36 {dimension_numbers = #tpu.dot_dimension_numbers<[1], [0], [0], [1], [0, 0, 1, 1], [], []>} : vector<8x128xbf16>, vector<128x128xbf16>, vector<8x128xf32> -> vector<8x128xf32>
    %c680 = arith.constant 680 : index
    %c0_37 = arith.constant 0 : index
    %97 = vector.load %arg2[%c680, %c0_37] : memref<752x128xf32, #tpu.memory_space<vmem>>, vector<64x8xf32>
    %cst_38 = arith.constant dense<0.000000e+00> : vector<64x128xf32>
    %98 = tpu.matmul %97, %96, %cst_38 {dimension_numbers = #tpu.dot_dimension_numbers<[1], [0], [0], [1], [0, 0, 1, 1], [], []>} : vector<64x8xf32>, vector<8x128xf32>, vector<64x128xf32> -> vector<64x128xf32>
    %99 = math.absf %98 : vector<64x128xf32>
    %c552 = arith.constant 552 : index
    %c0_39 = arith.constant 0 : index
    %100 = vector.load %arg2[%c552, %c0_39] : memref<752x128xf32, #tpu.memory_space<vmem>>, vector<128x16xf32>
    %101 = arith.truncf %99 : vector<64x128xf32> to vector<64x128xbf16>
    %102 = arith.truncf %100 : vector<128x16xf32> to vector<128x16xbf16>
    %cst_40 = arith.constant dense<0.000000e+00> : vector<64x16xf32>
    %103 = tpu.matmul %101, %102, %cst_40 {dimension_numbers = #tpu.dot_dimension_numbers<[1], [0], [0], [1], [0, 0, 1, 1], [], []>} : vector<64x128xbf16>, vector<128x16xbf16>, vector<64x16xf32> -> vector<64x16xf32>
    %cst_41 = arith.constant 0.000000e+00 : f32
    %104 = vector.broadcast %cst_41 : f32 to vector<64x16xf32>
    %105 = arith.subf %104, %103 : vector<64x16xf32>
    %106 = math.exp %105 : vector<64x16xf32>
    %c744 = arith.constant 744 : index
    %c0_42 = arith.constant 0 : index
    %107 = vector.load %arg2[%c744, %c0_42] : memref<752x128xf32, #tpu.memory_space<vmem>>, vector<8x64xf32>
    %cst_43 = arith.constant dense<0.000000e+00> : vector<8x16xf32>
    %108 = tpu.matmul %107, %106, %cst_43 {dimension_numbers = #tpu.dot_dimension_numbers<[1], [0], [0], [1], [0, 0, 1, 1], [], []>} : vector<8x64xf32>, vector<64x16xf32>, vector<8x16xf32> -> vector<8x16xf32>
    %cst_44 = arith.constant 1.000000e+00 : f32
    %109 = vector.broadcast %cst_44 : f32 to vector<8x16xf32>
    %110 = arith.subf %108, %109 : vector<8x16xf32>
    %c392 = arith.constant 392 : index
    %c0_45 = arith.constant 0 : index
    %111 = vector.load %arg2[%c392, %c0_45] : memref<752x128xf32, #tpu.memory_space<vmem>>, vector<128x128xf32>
    %112 = arith.truncf %92 : vector<8x128xf32> to vector<8x128xbf16>
    %113 = arith.truncf %111 : vector<128x128xf32> to vector<128x128xbf16>
    %cst_46 = arith.constant dense<0.000000e+00> : vector<8x128xf32>
    %114 = tpu.matmul %112, %113, %cst_46 {dimension_numbers = #tpu.dot_dimension_numbers<[1], [0], [0], [1], [0, 0, 1, 1], [], []>} : vector<8x128xbf16>, vector<128x128xbf16>, vector<8x128xf32> -> vector<8x128xf32>
    %c520 = arith.constant 520 : index
    %c0_47 = arith.constant 0 : index
    %115 = vector.load %arg2[%c520, %c0_47] : memref<752x128xf32, #tpu.memory_space<vmem>>, vector<16x128xf32>
    %cst_48 = arith.constant dense<0.000000e+00> : vector<8x128xf32>
    %116 = tpu.matmul %110, %115, %cst_48 {dimension_numbers = #tpu.dot_dimension_numbers<[1], [0], [0], [1], [0, 0, 1, 1], [], []>} : vector<8x16xf32>, vector<16x128xf32>, vector<8x128xf32> -> vector<8x128xf32>
    %117 = arith.addf %114, %116 : vector<8x128xf32>
    %c545 = arith.constant 545 : index
    %c0_49 = arith.constant 0 : index
    %118 = vector.load %arg2[%c545, %c0_49] : memref<752x128xf32, #tpu.memory_space<vmem>>, vector<1x128xf32>
    %119 = vector.broadcast %118 : vector<1x128xf32> to vector<8x128xf32>
    %120 = arith.addf %117, %119 : vector<8x128xf32>
    %cst_50 = arith.constant 0.000000e+00 : f32
    %121 = vector.broadcast %cst_50 : f32 to vector<8x128xf32>
    %122 = arith.cmpf ogt, %120, %121 : vector<8x128xf32>
    %123 = arith.extui %122 : vector<8x128xi1> to vector<8x128xi32>
    %124 = arith.sitofp %123 : vector<8x128xi32> to vector<8x128xf32>
    %c0_51 = arith.constant 0 : index
    %c0_52 = arith.constant 0 : index
    %c0_53 = arith.constant 0 : index
    %125 = vector.load %arg3[%c0_51, %c0_52, %c0_53] : memref<1x8x128xf32, #tpu.memory_space<vmem>>, vector<1x8x128xf32>
    %126 = vector.shape_cast %125 : vector<1x8x128xf32> to vector<8x128xf32>
    %127 = vector.shape_cast %124 : vector<8x128xf32> to vector<1x8x128xf32>
    tpu.vector_store %arg3[%c0_51, %c0_52, %c0_53], %127 {strides = array<i32>} : memref<1x8x128xf32, #tpu.memory_space<vmem>>, vector<1x8x128xf32>,
    return
  }
  func.func @transform_0(%arg0: i32) -> (i32, i32, i32) {
    %c0_i32 = arith.constant 0 : i32
    %c0_i32_0 = arith.constant 0 : i32
    %c0_i32_1 = arith.constant 0 : i32
    return %arg0, %c0_i32, %c0_i32_0 : i32, i32, i32
  }
  func.func @transform_1(%arg0: i32) -> (i32, i32) {
    %c0_i32 = arith.constant 0 : i32
    %c0_i32_0 = arith.constant 0 : i32
    %c0_i32_1 = arith.constant 0 : i32
    return %c0_i32, %c0_i32_0 : i32, i32
  }
  func.func @transform_2(%arg0: i32) -> (i32, i32, i32) {
    %c0_i32 = arith.constant 0 : i32
    %c0_i32_0 = arith.constant 0 : i32
    %c0_i32_1 = arith.constant 0 : i32
    return %arg0, %c0_i32, %c0_i32_0 : i32, i32, i32
  }
}

</mosaic_0001>

<llo_original>
// kernel: tpu_custom_call.1
$region0: #{tpu_custom_call.1}
  #allocation0 [shape = 'u32[]', space=smem, size = 0x4, offset = 0x4, fixed_abs, tag = 'smem constant byte address 0x4 - core index']
  #allocation1 [shape = 'u32[72,128]{1,0:T(1,128)}', space=vmem, size = 0x9000, scoped, tag = 'internal scratch']
  %s0 = inlined_call_operand.hbm [shape: f32[2,8,8], index: 0, kind: input, shape index: {}]
  %s1 = inlined_call_operand.hbm [shape: f32[752,128], index: 1, kind: input, shape index: {}]
  %s2 = inlined_call_operand.hbm [shape: f32[2,8,128], index: 2, kind: output, shape index: {}]
  %s3 = sld [smem:[#allocation0]]
  $region49: #{tpu_custom_call.1} parent=0
    _
  %s5 = ssub.s32 1, %s3
  %s6 = scalar_select 0, %s5, %s3
  $region1: #{tpu_custom_call.1} parent=0
    #allocation2 [shape = 'u8[8192]{0}', space=vmem, size = 0x2000, scoped, tag = 'input window, operand 0']
    #allocation3 [shape = 's32[2]{0}', space=sflag, size = 0x8, scoped, tag = 'scoped memory for tpu_custom_call.1']
    #allocation4 [shape = 's32[2]{0}', space=sflag, size = 0x8, scoped, tag = 'scoped memory for tpu_custom_call.1']
    #allocation5 [shape = 'u8[385024]{0}', space=vmem, size = 0x5e000, scoped, tag = 'input window, operand 1, single buffered']
    #allocation6 [shape = 's32[1]{0}', space=sflag, size = 0x4, scoped, tag = 'scoped memory for tpu_custom_call.1']
    #allocation7 [shape = 'u8[8192]{0}', space=vmem, size = 0x2000, scoped, tag = 'output window, operand 0']
    %7 = vsyncpa [#allocation3], 0
    %s8 = scalar_lea.sflag [#allocation3], 1
    %9 = vsyncpa %s8, 0
    %10 = vsyncpa [#allocation6], 0
    %11 = vsyncpa [#allocation4], 0
    %s12 = scalar_lea.sflag [#allocation4], 1
    %13 = vsyncpa %s12, 0
    loop: start=0, step=1, limit=4
    $region2: #{tpu_custom_call.1} parent=1 // loop_pre_header
      _
    $region3: #{tpu_custom_call.1} parent=1 // loop_header
      %s15 = sphi 0, %s19
      %p16 = scmp.ge.s32.totalorder %s15, 4
      %s25 = sphi 0, %s27
      %s28 = sphi 0, %s25
      %s29 = sphi 0, %s28
      %s45 = sphi 0, %s29
      %s49 = sphi 0, %s49
      %s51 = sphi 0, %s49
      %s52 = sphi 0, %s51
      %s66 = sphi 0, %s52
      %s72 = sphi 0, %s74
      %s75 = sphi 0, %s72
      %s76 = sphi 0, %s75
      %s92 = sphi 0, %s76
    $region4: #{tpu_custom_call.1} parent=1 // loop_header_branch
      %18 = sbr.rel (%p16) target = $region8
    $region5: #{tpu_custom_call.1} parent=1 // loop_body
      %s20 = ssub.s32 %s15, 1
      %s21 = ssub.s32 %s15, 2
      %s22 = sadd.s32 %s15, 1
      %s23 = ssub.s32 %s15, %s22
      %p24 = scmp.eq.s32.totalorder %s23, 0
      %s26 = sadd.s32 %s25, 1
      %s27 = scalar_select %p24, %s25, %s26
      %p30 = pneg %p24
      %p31 = scmp.eq.s32.totalorder %s15, 1
      %p32 = por %p30, %p31
      %p33 = scmp.ne.s32.totalorder %s25, %s28
      %p34 = scmp.eq.s32.totalorder %s15, 0
      %p35 = por %p33, %p34
      %p36 = scmp.ne.s32.totalorder %s25, %s28
      %p37 = scmp.eq.s32.totalorder %s20, 1
      %p38 = por %p36, %p37
      %p39 = scmp.ne.s32.totalorder %s28, %s29
      %p40 = scmp.eq.s32.totalorder %s20, 0
      %p41 = por %p39, %p40
      %p42 = scmp.ne.s32.totalorder %s28, %s29
      %p43 = scmp.eq.s32.totalorder %s21, 1
      %p44 = por %p42, %p43
      %p46 = scmp.ne.s32.totalorder %s29, %s45
      %p47 = scmp.eq.s32.totalorder %s21, 0
      %p48 = por %p46, %p47
      %s50 = sadd.s32 %s49, 1
      %p53 = scmp.eq.s32.totalorder %s15, 1
      %p54 = scmp.ne.s32.totalorder %s49, %s51
      %p55 = scmp.eq.s32.totalorder %s15, 0
      %p56 = por %p54, %p55
      %p57 = scmp.ne.s32.totalorder %s49, %s51
      %p58 = scmp.eq.s32.totalorder %s20, 1
      %p59 = por %p57, %p58
      %p60 = scmp.ne.s32.totalorder %s51, %s52
      %p61 = scmp.eq.s32.totalorder %s20, 0
      %p62 = por %p60, %p61
      %p63 = scmp.ne.s32.totalorder %s51, %s52
      %p64 = scmp.eq.s32.totalorder %s21, 1
      %p65 = por %p63, %p64
      %p67 = scmp.ne.s32.totalorder %s52, %s66
      %p68 = scmp.eq.s32.totalorder %s21, 0
      %p69 = por %p67, %p68
      %s70 = ssub.s32 %s15, %s22
      %p71 = scmp.eq.s32.totalorder %s70, 0
      %s73 = sadd.s32 %s72, 1
      %s74 = scalar_select %p71, %s72, %s73
      %p77 = pneg %p71
      %p78 = scmp.eq.s32.totalorder %s15, 1
      %p79 = por %p77, %p78
      %p80 = scmp.ne.s32.totalorder %s72, %s75
      %p81 = scmp.eq.s32.totalorder %s15, 0
      %p82 = por %p80, %p81
      %p83 = scmp.ne.s32.totalorder %s72, %s75
      %p84 = scmp.eq.s32.totalorder %s20, 1
      %p85 = por %p83, %p84
      %p86 = scmp.ne.s32.totalorder %s75, %s76
      %p87 = scmp.eq.s32.totalorder %s20, 0
      %p88 = por %p86, %p87
      %p89 = scmp.ne.s32.totalorder %s75, %s76
      %p90 = scmp.eq.s32.totalorder %s21, 1
      %p91 = por %p89, %p90
      %p93 = scmp.ne.s32.totalorder %s76, %s92
      %p94 = scmp.eq.s32.totalorder %s21, 0
      %p95 = por %p93, %p94
      %p96 = scmp.le.s32.totalorder 1, %s15
      %p97 = scmp.lt.s32.totalorder %s15, 3
      %p98 = pnand %p96, %p97
      %p99 = pneg %p98
      // Predicated region
      $region9: #{tpu_custom_call.1} parent=5 // pred_check
        _
      $region10: #{tpu_custom_call.1} parent=5 // pred_check_branch
        %101 = sbr.rel (%p98) target = $region12
      $region11: #{tpu_custom_call.1} parent=5 // pred_region
        %s102 = ssub.s32 %s15, 1
        // Predicated region
        $region13: #{tpu_custom_call.1} parent=11 // pred_check
          %p103 = pneg %p62
        $region14: #{tpu_custom_call.1} parent=11 // pred_check_branch
          %105 = sbr.rel (%p103) target = $region16
        $region15: #{tpu_custom_call.1} parent=11 // pred_region
          %107 = vsyncadd [#allocation6], 0
          %s108 = sshll.u32 %s1, 4
          %s109 = int_to_ptr.hbm [resolvable:$true] %s108
          %s110 = sshll.u32 [#allocation5], 4
          %s111 = int_to_ptr.vmem [resolvable:$true] %s110
          %116 = dma.hbm_to_vmem [thread:$0]  %s109, 12032, %s111, [#allocation6], 128, 128, 8
        $region16: #{tpu_custom_call.1} parent=11 // pred_fallthru
          _
      $region12: #{tpu_custom_call.1} parent=5 // pred_fallthru
        _
      %p117 = scmp.lt.s32.totalorder %s15, 2
      // Predicated region
      $region17: #{tpu_custom_call.1} parent=5 // pred_check
        %p118 = pneg %p117
      $region18: #{tpu_custom_call.1} parent=5 // pred_check_branch
        %120 = sbr.rel (%p118) target = $region20
      $region19: #{tpu_custom_call.1} parent=5 // pred_region
        // Predicated region
        $region21: #{tpu_custom_call.1} parent=19 // pred_check
          %p121 = pneg %p35
        $region22: #{tpu_custom_call.1} parent=19 // pred_check_branch
          %123 = sbr.rel (%p121) target = $region24
        $region23: #{tpu_custom_call.1} parent=19 // pred_region
          %s124 = sand.u32 %s25, 1
          %s125 = scalar_lea.sflag [#allocation3], %s124
          %s126 = sand.u32 %s25, 1
          %s127 = smul.addr %s126, 8
          %s128 = scalar_lea.vmem [#allocation2], %s127
          %130 = vsyncadd %s125, 0
          %s131 = smul.addr %s15, 8
          %s132 = scalar_lea.hbm %s0, %s131
          %s134 = sshll.u32 %s132, 4
          %s135 = int_to_ptr.hbm [resolvable:$true] %s134
          %s136 = sshll.u32 %s128, 4
          %s137 = int_to_ptr.vmem [resolvable:$true] %s136
          %139 = dma.hbm_to_vmem [thread:$0]  %s135, 128, %s137, %s125
        $region24: #{tpu_custom_call.1} parent=19 // pred_fallthru
          _
      $region20: #{tpu_custom_call.1} parent=5 // pred_fallthru
        _
      %p140 = scmp.le.s32.totalorder 1, %s15
      %p141 = scmp.lt.s32.totalorder %s15, 3
      %p142 = pnand %p140, %p141
      %p143 = pneg %p142
      // Predicated region
      $region25: #{tpu_custom_call.1} parent=5 // pred_check
        _
      $region26: #{tpu_custom_call.1} parent=5 // pred_check_branch
        %145 = sbr.rel (%p142) target = $region28
      $region27: #{tpu_custom_call.1} parent=5 // pred_region
        %s146 = ssub.s32 %s15, 1
        %s147 = sand.u32 %s28, 1
        %s148 = scalar_lea.sflag [#allocation3], %s147
        %s149 = sand.u32 %s28, 1
        %s150 = smul.addr %s149, 8
        %s151 = scalar_lea.vmem [#allocation2], %s150
        // Predicated region
        $region29: #{tpu_custom_call.1} parent=27 // pred_check
          %p152 = pneg %p41
        $region30: #{tpu_custom_call.1} parent=27 // pred_check_branch
          %154 = sbr.rel (%p152) target = $region32
        $region31: #{tpu_custom_call.1} parent=27 // pred_region
          %156 = dma.done %s148, 128
        $region32: #{tpu_custom_call.1} parent=27 // pred_fallthru
          _
        // Predicated region
        $region33: #{tpu_custom_call.1} parent=27 // pred_check
          %p157 = pneg %p62
        $region34: #{tpu_custom_call.1} parent=27 // pred_check_branch
          %159 = sbr.rel (%p157) target = $region36
        $region35: #{tpu_custom_call.1} parent=27 // pred_region
          %161 = dma.done [#allocation6], 12032
        $region36: #{tpu_custom_call.1} parent=27 // pred_fallthru
          _
        %s162 = sand.u32 %s28, 1
        %s163 = scalar_lea.sflag [#allocation3], %s162
        %s164 = sand.u32 %s28, 1
        %s165 = smul.addr %s164, 8
        %s166 = scalar_lea.vmem [#allocation2], %s165
        %p167 = pneg %p41
        %p168 = pneg %p38
        %p169 = pneg %p62
        %p170 = pneg %p59
        %p171 = pneg %p88
        %p172 = pneg %p85
        %s173 = sand.u32 %s75, 1
        %s174 = scalar_lea.sflag [#allocation4], %s173
        %s175 = sand.u32 %s75, 1
        %s176 = smul.addr %s175, 8
        %s177 = scalar_lea.vmem [#allocation7], %s176
        %v178 = vld [vmem:[%s151] sm:$0xff]
        %v179 = vld [vmem:[#allocation5] sm:$0xff]
        %v180 = vld [vmem:[#allocation5 + $0x218] sm:$0x1]
        %v181 = vld [vmem:[#allocation5 + $0x219] sm:$0x1]
        %v182 = vld [vmem:[#allocation5 + $0x21a] sm:$0x1]
        %v183 = vperm.slane %v180, 0
        %vm184 = vcmask 64512
        %v186 = vsel %vm184, %v178, 0
        %188 = vmatpush.msra.mxu0 0.0
        %189 = vmatpush.msra.mxu0 0.0
        %190 = vmatpush.msra.mxu0 0.0
        %191 = vmatpush.msra.mxu0 0.0
        %192 = vmatpush.msra.mxu0 0.0
        %193 = vmatpush.msra.mxu0 0.0
        %194 = vmatpush.msra.mxu0 0.0
        %195 = vmatpush.msra.mxu0 0.0
        %196 = vmatpush.msra.mxu0 0.0
        %197 = vmatpush.msra.mxu0 0.0
        %198 = vmatpush.msra.mxu0 0.0
        %199 = vmatpush.msra.mxu0 0.0
        %200 = vmatpush.msra.mxu0 0.0
        %201 = vmatpush.msra.mxu0 0.0
        %202 = vmatpush.msra.mxu0 0.0
        %203 = vmatpush.msra.mxu0 %v179
        %204 = vmatmul.f32.gmra.mxu0 %v186
        %v205 = vpop.f32.mrf.mxu0
        %v206 = vadd.f32 %v183, %v205
        %207 = vdwg.mxu0
        %v208 = vmul.f32 %v206, 0.2
        %v209 = vmax.f32 %v206, %v208
        %v210 = vrot.slane %v209, 4
        %v211 = vadd.f32 %v209, %v210
        %v212 = vrot.slane %v211, 2
        %v213 = vadd.f32 %v211, %v212
        %v214 = vrot.slane %v213, 1
        %v215 = vadd.f32 %v213, %v214
        %v216 = vrcp.pop 8.0
        %v217 = vmul.f32 8.0, %v216
        %v218 = vsub.f32 1.0, %v217
        %v219 = vmul.f32 %v216, %v218
        %v220 = vadd.f32 %v216, %v219
        %vm221 = vweird.f32 %v216
        %v222 = vsel %vm221, %v216, %v220
        %v223 = vmul.f32 %v215, %v222
        %v224 = vsub.f32 %v209, %v223
        %v225 = vmul.f32 %v224, %v224
        %v226 = vrot.slane %v225, 4
        %v227 = vadd.f32 %v225, %v226
        %v228 = vrot.slane %v227, 2
        %v229 = vadd.f32 %v227, %v228
        %v230 = vrot.slane %v229, 1
        %v231 = vadd.f32 %v229, %v230
        %v232 = vmul.f32 %v231, %v222
        %v233 = vadd.f32 %v232, 1e-05
        %v234 = vrsqrt.pop %v233
        %v235 = vmul.f32 %v234, %v233
        %v236 = vmul.f32 %v235, %v234
        %v237 = vmul.f32 0.5, %v236
        %v238 = vsub.f32 1.5, %v237
        %v239 = vmul.f32 %v234, %v238
        %vm240 = vweird.f32 %v233
        %vm241 = vweird.f32 %v234
        %vm242 = vmor %vm240, %vm241
        %v243 = vsel %vm242, %v234, %v239
        %v244 = vmul.f32 %v181, %v243
        %v245 = vperm.slane %v244, 0
        %v246 = vmul.f32 %v224, %v245
        %v247 = vperm.slane %v182, 0
        %v248 = vadd.f32 %v246, %v247
        %v249 = vld [vmem:[#allocation5 + $0x8] sm:$0xff]
        %v250 = vld [vmem:[#allocation5 + $0x10] sm:$0xff]
        %v251 = vld [vmem:[#allocation5 + $0x18] sm:$0xff]
        %v252 = vld [vmem:[#allocation5 + $0x20] sm:$0xff]
        %v253 = vld [vmem:[#allocation5 + $0x28] sm:$0xff]
        %v254 = vld [vmem:[#allocation5 + $0x30] sm:$0xff]
        %v255 = vld [vmem:[#allocation5 + $0x38] sm:$0xff]
        %v256 = vld [vmem:[#allocation5 + $0x40] sm:$0xff]
        %v257 = vld [vmem:[#allocation5 + $0x48] sm:$0xff]
        %v258 = vld [vmem:[#allocation5 + $0x50] sm:$0xff]
        %v259 = vld [vmem:[#allocation5 + $0x58] sm:$0xff]
        %v260 = vld [vmem:[#allocation5 + $0x60] sm:$0xff]
        %v261 = vld [vmem:[#allocation5 + $0x68] sm:$0xff]
        %v262 = vld [vmem:[#allocation5 + $0x70] sm:$0xff]
        %v263 = vld [vmem:[#allocation5 + $0x78] sm:$0xff]
        %v264 = vld [vmem:[#allocation5 + $0x80] sm:$0xff]
        %v265 = vpack.c.bf16 %v248, %v248
        %v266 = vpack.c.bf16 %v250, %v249
        %v267 = vpack.c.bf16 %v252, %v251
        %v268 = vpack.c.bf16 %v254, %v253
        %v269 = vpack.c.bf16 %v256, %v255
        %v270 = vpack.c.bf16 %v258, %v257
        %v271 = vpack.c.bf16 %v260, %v259
        %v272 = vpack.c.bf16 %v262, %v261
        %v273 = vpack.c.bf16 %v264, %v263
        %v274 = vld [vmem:[#allocation5 + $0x21b] sm:$0x1]
        %v275 = vld [vmem:[#allocation5 + $0x21c] sm:$0x1]
        %v276 = vld [vmem:[#allocation5 + $0x21d] sm:$0x1]
        %v277 = vperm.slane %v274, 0
        %278 = vmatpush.bf16.msra.mxu0 %v273
        %279 = vmatpush.bf16.msra.mxu0 %v272
        %280 = vmatpush.bf16.msra.mxu0 %v271
        %281 = vmatpush.bf16.msra.mxu0 %v270
        %282 = vmatpush.bf16.msra.mxu0 %v269
        %283 = vmatpush.bf16.msra.mxu0 %v268
        %284 = vmatpush.bf16.msra.mxu0 %v267
        %285 = vmatpush.bf16.msra.mxu0 %v266
        %286 = vmatmul.bf16.gmra.mxu0 %v265
        %v287 = vpop.f32.mrf.mxu0
        %v288 = vadd.f32 %v277, %v287
        %v289 = vpop.f32.mrf.mxu0
        %290 = vdwg.mxu0
        %v291 = vmul.f32 %v288, 0.2
        %v292 = vmax.f32 %v288, %v291
        %v293 = vrot.slane %v292, 4
        %v294 = vadd.f32 %v292, %v293
        %v295 = vrot.slane %v294, 2
        %v296 = vadd.f32 %v294, %v295
        %v297 = vrot.slane %v296, 1
        %v298 = vadd.f32 %v296, %v297
        %v299 = vmul.f32 %v298, %v222
        %v300 = vsub.f32 %v292, %v299
        %v301 = vmul.f32 %v300, %v300
        %v302 = vrot.slane %v301, 4
        %v303 = vadd.f32 %v301, %v302
        %v304 = vrot.slane %v303, 2
        %v305 = vadd.f32 %v303, %v304
        %v306 = vrot.slane %v305, 1
        %v307 = vadd.f32 %v305, %v306
        %v308 = vmul.f32 %v307, %v222
        %v309 = vadd.f32 %v308, 1e-05
        %v310 = vrsqrt.pop %v309
        %v311 = vmul.f32 %v310, %v309
        %v312 = vmul.f32 %v311, %v310
        %v313 = vmul.f32 0.5, %v312
        %v314 = vsub.f32 1.5, %v313
        %v315 = vmul.f32 %v310, %v314
        %vm316 = vweird.f32 %v309
        %vm317 = vweird.f32 %v310
        %vm318 = vmor %vm316, %vm317
        %v319 = vsel %vm318, %v310, %v315
        %v320 = vmul.f32 %v275, %v319
        %v321 = vperm.slane %v320, 0
        %v322 = vmul.f32 %v300, %v321
        %v323 = vperm.slane %v276, 0
        %v324 = vadd.f32 %v322, %v323
        %v325 = vld [vmem:[#allocation5 + $0x88] sm:$0xff]
        %v326 = vld [vmem:[#allocation5 + $0x90] sm:$0xff]
        %v327 = vld [vmem:[#allocation5 + $0x98] sm:$0xff]
        %v328 = vld [vmem:[#allocation5 + $0xa0] sm:$0xff]
        %v329 = vld [vmem:[#allocation5 + $0xa8] sm:$0xff]
        %v330 = vld [vmem:[#allocation5 + $0xb0] sm:$0xff]
        %v331 = vld [vmem:[#allocation5 + $0xb8] sm:$0xff]
        %v332 = vld [vmem:[#allocation5 + $0xc0] sm:$0xff]
        %v333 = vld [vmem:[#allocation5 + $0xc8] sm:$0xff]
        %v334 = vld [vmem:[#allocation5 + $0xd0] sm:$0xff]
        %v335 = vld [vmem:[#allocation5 + $0xd8] sm:$0xff]
        %v336 = vld [vmem:[#allocation5 + $0xe0] sm:$0xff]
        %v337 = vld [vmem:[#allocation5 + $0xe8] sm:$0xff]
        %v338 = vld [vmem:[#allocation5 + $0xf0] sm:$0xff]
        %v339 = vld [vmem:[#allocation5 + $0xf8] sm:$0xff]
        %v340 = vld [vmem:[#allocation5 + $0x100] sm:$0xff]
        %v341 = vpack.c.bf16 %v324, %v324
        %v342 = vpack.c.bf16 %v326, %v325
        %v343 = vpack.c.bf16 %v328, %v327
        %v344 = vpack.c.bf16 %v330, %v329
        %v345 = vpack.c.bf16 %v332, %v331
        %v346 = vpack.c.bf16 %v334, %v333
        %v347 = vpack.c.bf16 %v336, %v335
        %v348 = vpack.c.bf16 %v338, %v337
        %v349 = vpack.c.bf16 %v340, %v339
        %v350 = vld [vmem:[#allocation5 + $0x21e] sm:$0x1]
        %v351 = vld [vmem:[#allocation5 + $0x21f] sm:$0x1]
        %v352 = vld [vmem:[#allocation5 + $0x220] sm:$0x1]
        %v353 = vperm.slane %v350, 0
        %354 = vmatpush.bf16.msra.mxu0 %v349
        %355 = vmatpush.bf16.msra.mxu0 %v348
        %356 = vmatpush.bf16.msra.mxu0 %v347
        %357 = vmatpush.bf16.msra.mxu0 %v346
        %358 = vmatpush.bf16.msra.mxu0 %v345
        %359 = vmatpush.bf16.msra.mxu0 %v344
        %360 = vmatpush.bf16.msra.mxu0 %v343
        %361 = vmatpush.bf16.msra.mxu0 %v342
        %362 = vmatmul.bf16.gmra.mxu0 %v341
        %v363 = vpop.f32.mrf.mxu0
        %v364 = vadd.f32 %v353, %v363
        %v365 = vpop.f32.mrf.mxu0
        %366 = vdwg.mxu0
        %v367 = vmul.f32 %v364, 0.2
        %v368 = vmax.f32 %v364, %v367
        %v369 = vrot.slane %v368, 4
        %v370 = vadd.f32 %v368, %v369
        %v371 = vrot.slane %v370, 2
        %v372 = vadd.f32 %v370, %v371
        %v373 = vrot.slane %v372, 1
        %v374 = vadd.f32 %v372, %v373
        %v375 = vmul.f32 %v374, %v222
        %v376 = vsub.f32 %v368, %v375
        %v377 = vmul.f32 %v376, %v376
        %v378 = vrot.slane %v377, 4
        %v379 = vadd.f32 %v377, %v378
        %v380 = vrot.slane %v379, 2
        %v381 = vadd.f32 %v379, %v380
        %v382 = vrot.slane %v381, 1
        %v383 = vadd.f32 %v381, %v382
        %v384 = vmul.f32 %v383, %v222
        %v385 = vadd.f32 %v384, 1e-05
        %v386 = vrsqrt.pop %v385
        %v387 = vmul.f32 %v386, %v385
        %v388 = vmul.f32 %v387, %v386
        %v389 = vmul.f32 0.5, %v388
        %v390 = vsub.f32 1.5, %v389
        %v391 = vmul.f32 %v386, %v390
        %vm392 = vweird.f32 %v385
        %vm393 = vweird.f32 %v386
        %vm394 = vmor %vm392, %vm393
        %v395 = vsel %vm394, %v386, %v391
        %v396 = vmul.f32 %v351, %v395
        %v397 = vperm.slane %v396, 0
        %v398 = vmul.f32 %v376, %v397
        %v399 = vperm.slane %v352, 0
        %v400 = vadd.f32 %v398, %v399
        %v401 = vld [vmem:[#allocation5 + $0x108] sm:$0xff]
        %v402 = vld [vmem:[#allocation5 + $0x110] sm:$0xff]
        %v403 = vld [vmem:[#allocation5 + $0x118] sm:$0xff]
        %v404 = vld [vmem:[#allocation5 + $0x120] sm:$0xff]
        %v405 = vld [vmem:[#allocation5 + $0x128] sm:$0xff]
        %v406 = vld [vmem:[#allocation5 + $0x130] sm:$0xff]
        %v407 = vld [vmem:[#allocation5 + $0x138] sm:$0xff]
        %v408 = vld [vmem:[#allocation5 + $0x140] sm:$0xff]
        %v409 = vld [vmem:[#allocation5 + $0x148] sm:$0xff]
        %v410 = vld [vmem:[#allocation5 + $0x150] sm:$0xff]
        %v411 = vld [vmem:[#allocation5 + $0x158] sm:$0xff]
        %v412 = vld [vmem:[#allocation5 + $0x160] sm:$0xff]
        %v413 = vld [vmem:[#allocation5 + $0x168] sm:$0xff]
        %v414 = vld [vmem:[#allocation5 + $0x170] sm:$0xff]
        %v415 = vld [vmem:[#allocation5 + $0x178] sm:$0xff]
        %v416 = vld [vmem:[#allocation5 + $0x180] sm:$0xff]
        %v417 = vpack.c.bf16 %v400, %v400
        %v418 = vpack.c.bf16 %v402, %v401
        %v419 = vpack.c.bf16 %v404, %v403
        %v420 = vpack.c.bf16 %v406, %v405
        %v421 = vpack.c.bf16 %v408, %v407
        %v422 = vpack.c.bf16 %v410, %v409
        %v423 = vpack.c.bf16 %v412, %v411
        %v424 = vpack.c.bf16 %v414, %v413
        %v425 = vpack.c.bf16 %v416, %v415
        %426 = vmatpush.bf16.msra.mxu0 %v425
        %427 = vmatpush.bf16.msra.mxu0 %v424
        %428 = vmatpush.bf16.msra.mxu0 %v423
        %429 = vmatpush.bf16.msra.mxu0 %v422
        %430 = vmatpush.bf16.msra.mxu0 %v421
        %431 = vmatpush.bf16.msra.mxu0 %v420
        %432 = vmatpush.bf16.msra.mxu0 %v419
        %433 = vmatpush.bf16.msra.mxu0 %v418
        %434 = vmatmul.bf16.gmra.mxu0 %v417
        %v435 = vpop.f32.mrf.mxu0
        %v436 = vadd.f32 0.0, %v435
        %v437 = vpop.f32.mrf.mxu0
        %438 = vdwg.mxu0
        %v439 = vld [vmem:[#allocation5 + $0x2a8] sm:$0xff]
        %v440 = vld [vmem:[#allocation5 + $0x2b0] sm:$0xff]
        %v441 = vld [vmem:[#allocation5 + $0x2b8] sm:$0xff]
        %v442 = vld [vmem:[#allocation5 + $0x2c0] sm:$0xff]
        %v443 = vld [vmem:[#allocation5 + $0x2c8] sm:$0xff]
        %v444 = vld [vmem:[#allocation5 + $0x2d0] sm:$0xff]
        %v445 = vld [vmem:[#allocation5 + $0x2d8] sm:$0xff]
        %v446 = vld [vmem:[#allocation5 + $0x2e0] sm:$0xff]
        %v448 = vsel %vm184, %v439, 0
        %v451 = vsel %vm184, %v440, 0
        %v454 = vsel %vm184, %v441, 0
        %v457 = vsel %vm184, %v442, 0
        %v460 = vsel %vm184, %v443, 0
        %v463 = vsel %vm184, %v444, 0
        %v466 = vsel %vm184, %v445, 0
        %v469 = vsel %vm184, %v446, 0
        %471 = vmatpush.msra.mxu0 0.0
        %472 = vmatpush.msra.mxu0 0.0
        %473 = vmatpush.msra.mxu0 0.0
        %474 = vmatpush.msra.mxu0 0.0
        %475 = vmatpush.msra.mxu0 0.0
        %476 = vmatpush.msra.mxu0 0.0
        %477 = vmatpush.msra.mxu0 0.0
        %478 = vmatpush.msra.mxu0 0.0
        %479 = vmatpush.msra.mxu0 0.0
        %480 = vmatpush.msra.mxu0 0.0
        %481 = vmatpush.msra.mxu0 0.0
        %482 = vmatpush.msra.mxu0 0.0
        %483 = vmatpush.msra.mxu0 0.0
        %484 = vmatpush.msra.mxu0 0.0
        %485 = vmatpush.msra.mxu0 0.0
        %486 = vmatpush.msra.mxu0 %v436
        %487 = vmatmul.f32.gmra.mxu0 %v448
        %v488 = vpop.f32.mrf.mxu0
        %v489 = vadd.f32 0.0, %v488
        %490 = vmatmul.f32.gmra.mxu0 %v451
        %v491 = vpop.f32.mrf.mxu0
        %v492 = vadd.f32 0.0, %v491
        %493 = vmatmul.f32.gmra.mxu0 %v454
        %v494 = vpop.f32.mrf.mxu0
        %v495 = vadd.f32 0.0, %v494
        %496 = vmatmul.f32.gmra.mxu0 %v457
        %v497 = vpop.f32.mrf.mxu0
        %v498 = vadd.f32 0.0, %v497
        %499 = vmatmul.f32.gmra.mxu0 %v460
        %v500 = vpop.f32.mrf.mxu0
        %v501 = vadd.f32 0.0, %v500
        %502 = vmatmul.f32.gmra.mxu0 %v463
        %v503 = vpop.f32.mrf.mxu0
        %v504 = vadd.f32 0.0, %v503
        %505 = vmatmul.f32.gmra.mxu0 %v466
        %v506 = vpop.f32.mrf.mxu0
        %v507 = vadd.f32 0.0, %v506
        %508 = vmatmul.f32.gmra.mxu0 %v469
        %v509 = vpop.f32.mrf.mxu0
        %v510 = vadd.f32 0.0, %v509
        %511 = vdwg.mxu0
        %v512 = vand.u32 2147483647, %v489
        %v513 = vand.u32 2147483647, %v492
        %v514 = vand.u32 2147483647, %v495
        %v515 = vand.u32 2147483647, %v498
        %v516 = vand.u32 2147483647, %v501
        %v517 = vand.u32 2147483647, %v504
        %v518 = vand.u32 2147483647, %v507
        %v519 = vand.u32 2147483647, %v510
        %v520 = vld [vmem:[#allocation5 + $0x228] sm:$0xff]
        %v521 = vld [vmem:[#allocation5 + $0x230] sm:$0xff]
        %v522 = vld [vmem:[#allocation5 + $0x238] sm:$0xff]
        %v523 = vld [vmem:[#allocation5 + $0x240] sm:$0xff]
        %v524 = vld [vmem:[#allocation5 + $0x248] sm:$0xff]
        %v525 = vld [vmem:[#allocation5 + $0x250] sm:$0xff]
        %v526 = vld [vmem:[#allocation5 + $0x258] sm:$0xff]
        %v527 = vld [vmem:[#allocation5 + $0x260] sm:$0xff]
        %v528 = vld [vmem:[#allocation5 + $0x268] sm:$0xff]
        %v529 = vld [vmem:[#allocation5 + $0x270] sm:$0xff]
        %v530 = vld [vmem:[#allocation5 + $0x278] sm:$0xff]
        %v531 = vld [vmem:[#allocation5 + $0x280] sm:$0xff]
        %v532 = vld [vmem:[#allocation5 + $0x288] sm:$0xff]
        %v533 = vld [vmem:[#allocation5 + $0x290] sm:$0xff]
        %v534 = vld [vmem:[#allocation5 + $0x298] sm:$0xff]
        %v535 = vld [vmem:[#allocation5 + $0x2a0] sm:$0xff]
        %v536 = vpack.c.bf16 %v513, %v512
        %v537 = vpack.c.bf16 %v515, %v514
        %v538 = vpack.c.bf16 %v517, %v516
        %v539 = vpack.c.bf16 %v519, %v518
        %v540 = vpack.c.bf16 %v521, %v520
        %v541 = vpack.c.bf16 %v523, %v522
        %v542 = vpack.c.bf16 %v525, %v524
        %v543 = vpack.c.bf16 %v527, %v526
        %v544 = vpack.c.bf16 %v529, %v528
        %v545 = vpack.c.bf16 %v531, %v530
        %v546 = vpack.c.bf16 %v533, %v532
        %v547 = vpack.c.bf16 %v535, %v534
        %548 = vmatpush.bf16.msra.mxu0 %v547
        %549 = vmatpush.bf16.msra.mxu0 %v546
        %550 = vmatpush.bf16.msra.mxu0 %v545
        %551 = vmatpush.bf16.msra.mxu0 %v544
        %552 = vmatpush.bf16.msra.mxu0 %v543
        %553 = vmatpush.bf16.msra.mxu0 %v542
        %554 = vmatpush.bf16.msra.mxu0 %v541
        %555 = vmatpush.bf16.msra.mxu0 %v540
        %556 = vmatmul.bf16.gmra.mxu0 %v536
        %v557 = vpop.f32.mrf.mxu0
        %v558 = vadd.f32 0.0, %v557
        %v559 = vpop.f32.mrf.mxu0
        %v560 = vadd.f32 0.0, %v559
        %561 = vmatmul.bf16.gmra.mxu0 %v537
        %v562 = vpop.f32.mrf.mxu0
        %v563 = vadd.f32 0.0, %v562
        %v564 = vpop.f32.mrf.mxu0
        %v565 = vadd.f32 0.0, %v564
        %566 = vmatmul.bf16.gmra.mxu0 %v538
        %v567 = vpop.f32.mrf.mxu0
        %v568 = vadd.f32 0.0, %v567
        %v569 = vpop.f32.mrf.mxu0
        %v570 = vadd.f32 0.0, %v569
        %571 = vmatmul.bf16.gmra.mxu0 %v539
        %v572 = vpop.f32.mrf.mxu0
        %v573 = vadd.f32 0.0, %v572
        %v574 = vpop.f32.mrf.mxu0
        %v575 = vadd.f32 0.0, %v574
        %576 = vdwg.mxu0
        %v577 = vsub.f32 0.0, %v558
        %v578 = vsub.f32 0.0, %v560
        %v579 = vsub.f32 0.0, %v563
        %v580 = vsub.f32 0.0, %v565
        %v581 = vsub.f32 0.0, %v568
        %v582 = vsub.f32 0.0, %v570
        %v583 = vsub.f32 0.0, %v573
        %v584 = vsub.f32 0.0, %v575
        %v585 = vmul.f32 %v577, 1.442695
        %v586 = vpow.pop %v585
        %v587 = vmul.f32 %v578, 1.442695
        %v588 = vpow.pop %v587
        %v589 = vmul.f32 %v579, 1.442695
        %v590 = vpow.pop %v589
        %v591 = vmul.f32 %v580, 1.442695
        %v592 = vpow.pop %v591
        %v593 = vmul.f32 %v581, 1.442695
        %v594 = vpow.pop %v593
        %v595 = vmul.f32 %v582, 1.442695
        %v596 = vpow.pop %v595
        %v597 = vmul.f32 %v583, 1.442695
        %v598 = vpow.pop %v597
        %v599 = vmul.f32 %v584, 1.442695
        %v600 = vpow.pop %v599
        %v601 = vld [vmem:[#allocation5 + $0x2e8] sm:$0xff]
        %vm602 = vcmask 523264
        %v604 = vsel %vm602, %v601, 0
        %606 = vmatpush.msra.mxu0 0.0
        %607 = vmatpush.msra.mxu0 0.0
        %608 = vmatpush.msra.mxu0 0.0
        %609 = vmatpush.msra.mxu0 0.0
        %610 = vmatpush.msra.mxu0 0.0
        %611 = vmatpush.msra.mxu0 0.0
        %612 = vmatpush.msra.mxu0 0.0
        %613 = vmatpush.msra.mxu0 0.0
        %614 = vmatpush.msra.mxu0 %v600
        %615 = vmatpush.msra.mxu0 %v598
        %616 = vmatpush.msra.mxu0 %v596
        %617 = vmatpush.msra.mxu0 %v594
        %618 = vmatpush.msra.mxu0 %v592
        %619 = vmatpush.msra.mxu0 %v590
        %620 = vmatpush.msra.mxu0 %v588
        %621 = vmatpush.msra.mxu0 %v586
        %622 = vmatmul.f32.gmra.mxu0 %v604
        %v623 = vpop.f32.mrf.mxu0
        %v624 = vadd.f32 0.0, %v623
        %625 = vdwg.mxu0
        %v626 = vsub.f32 %v624, 1.0
        %v627 = vld [vmem:[#allocation5 + $0x188] sm:$0xff]
        %v628 = vld [vmem:[#allocation5 + $0x190] sm:$0xff]
        %v629 = vld [vmem:[#allocation5 + $0x198] sm:$0xff]
        %v630 = vld [vmem:[#allocation5 + $0x1a0] sm:$0xff]
        %v631 = vld [vmem:[#allocation5 + $0x1a8] sm:$0xff]
        %v632 = vld [vmem:[#allocation5 + $0x1b0] sm:$0xff]
        %v633 = vld [vmem:[#allocation5 + $0x1b8] sm:$0xff]
        %v634 = vld [vmem:[#allocation5 + $0x1c0] sm:$0xff]
        %v635 = vld [vmem:[#allocation5 + $0x1c8] sm:$0xff]
        %v636 = vld [vmem:[#allocation5 + $0x1d0] sm:$0xff]
        %v637 = vld [vmem:[#allocation5 + $0x1d8] sm:$0xff]
        %v638 = vld [vmem:[#allocation5 + $0x1e0] sm:$0xff]
        %v639 = vld [vmem:[#allocation5 + $0x1e8] sm:$0xff]
        %v640 = vld [vmem:[#allocation5 + $0x1f0] sm:$0xff]
        %v641 = vld [vmem:[#allocation5 + $0x1f8] sm:$0xff]
        %v642 = vld [vmem:[#allocation5 + $0x200] sm:$0xff]
        %v643 = vpack.c.bf16 %v628, %v627
        %v644 = vpack.c.bf16 %v630, %v629
        %v645 = vpack.c.bf16 %v632, %v631
        %v646 = vpack.c.bf16 %v634, %v633
        %v647 = vpack.c.bf16 %v636, %v635
        %v648 = vpack.c.bf16 %v638, %v637
        %v649 = vpack.c.bf16 %v640, %v639
        %v650 = vpack.c.bf16 %v642, %v641
        %v651 = vld [vmem:[#allocation5 + $0x208] sm:$0xff]
        %v652 = vld [vmem:[#allocation5 + $0x210] sm:$0xff]
        %vm653 = vcmask 130048
        %v655 = vsel %vm653, %v626, 0
        %657 = vmatpush.msra.mxu0 0.0
        %658 = vmatpush.msra.mxu0 0.0
        %659 = vmatpush.msra.mxu0 0.0
        %660 = vmatpush.msra.mxu0 0.0
        %661 = vmatpush.msra.mxu0 0.0
        %662 = vmatpush.msra.mxu0 0.0
        %663 = vmatpush.msra.mxu0 0.0
        %664 = vmatpush.msra.mxu0 0.0
        %665 = vmatpush.msra.mxu0 0.0
        %666 = vmatpush.msra.mxu0 0.0
        %667 = vmatpush.msra.mxu0 0.0
        %668 = vmatpush.msra.mxu0 0.0
        %669 = vmatpush.msra.mxu0 0.0
        %670 = vmatpush.msra.mxu0 0.0
        %671 = vmatpush.msra.mxu0 %v652
        %672 = vmatpush.msra.mxu0 %v651
        %673 = vmatmul.f32.gmra.mxu0 %v655
        %v674 = vpop.f32.mrf.mxu0
        %v675 = vadd.f32 0.0, %v674
        %676 = vdwg.mxu0
        %677 = vmatpush.bf16.msra.mxu0 %v650
        %678 = vmatpush.bf16.msra.mxu0 %v649
        %679 = vmatpush.bf16.msra.mxu0 %v648
        %680 = vmatpush.bf16.msra.mxu0 %v647
        %681 = vmatpush.bf16.msra.mxu0 %v646
        %682 = vmatpush.bf16.msra.mxu0 %v645
        %683 = vmatpush.bf16.msra.mxu0 %v644
        %684 = vmatpush.bf16.msra.mxu0 %v643
        %685 = vmatmul.bf16.gmra.mxu0 %v417
        %v686 = vpop.f32.mrf.mxu0
        %v687 = vadd.f32 %v675, %v686
        %v688 = vpop.f32.mrf.mxu0
        %689 = vdwg.mxu0
        %v690 = vld [vmem:[#allocation5 + $0x221] sm:$0x1]
        %v691 = vperm.slane %v690, 0
        %v692 = vadd.f32 %v687, %v691
        %vm693 = vcmp.gt.f32.partialorder %v692, 0.0
        %v694 = vsel %vm693, 1, 0
        %v695 = vcvt.s32.f32 %v694
        %696 = vst [vmem:[%s177] sm:$0xff] %v695
        %s697 = sand.u32 %s75, 1
        %s698 = scalar_lea.sflag [#allocation4], %s697
        %s699 = sand.u32 %s75, 1
        %s700 = smul.addr %s699, 8
        %s701 = scalar_lea.vmem [#allocation7], %s700
        // Predicated region
        $region37: #{tpu_custom_call.1} parent=27 // pred_check
          %p702 = pneg %p85
        $region38: #{tpu_custom_call.1} parent=27 // pred_check_branch
          %704 = sbr.rel (%p702) target = $region40
        $region39: #{tpu_custom_call.1} parent=27 // pred_region
          %706 = vsyncadd %s698, 0
          %s707 = smul.addr %s20, 8
          %s708 = scalar_lea.hbm %s2, %s707
          %s710 = sshll.u32 %s701, 4
          %s711 = int_to_ptr.vmem [resolvable:$true] %s710
          %s712 = sshll.u32 %s708, 4
          %s713 = int_to_ptr.hbm [resolvable:$true] %s712
          %715 = dma.vmem_to_hbm [thread:$0]  %s711, 128, %s713, %s698
        $region40: #{tpu_custom_call.1} parent=27 // pred_fallthru
          _
      $region28: #{tpu_custom_call.1} parent=5 // pred_fallthru
        _
      %p716 = scmp.le.s32.totalorder 2, %s15
      // Predicated region
      $region41: #{tpu_custom_call.1} parent=5 // pred_check
        %p717 = pneg %p716
      $region42: #{tpu_custom_call.1} parent=5 // pred_check_branch
        %719 = sbr.rel (%p717) target = $region44
      $region43: #{tpu_custom_call.1} parent=5 // pred_region
        %s720 = ssub.s32 %s15, 2
        // Predicated region
        $region45: #{tpu_custom_call.1} parent=43 // pred_check
          %p721 = pneg %p91
        $region46: #{tpu_custom_call.1} parent=43 // pred_check_branch
          %723 = sbr.rel (%p721) target = $region48
        $region47: #{tpu_custom_call.1} parent=43 // pred_region
          %s724 = sand.u32 %s76, 1
          %s725 = scalar_lea.sflag [#allocation4], %s724
          %s726 = sand.u32 %s76, 1
          %s727 = smul.addr %s726, 8
          %s728 = scalar_lea.vmem [#allocation7], %s727
          %730 = dma.done %s725, 128
        $region48: #{tpu_custom_call.1} parent=43 // pred_fallthru
          _
      $region44: #{tpu_custom_call.1} parent=5 // pred_fallthru
        _
    $region6: #{tpu_custom_call.1} parent=1 // loop_footer
      %s19 = sadd.s32 1, %s15
    $region7: #{tpu_custom_call.1} parent=1 // loop_footer_branch
      %14 = sbr.rel target = $region3
    $region8: #{tpu_custom_call.1} parent=1 // loop_exit
      _
    %731 = vsyncpa [#allocation3], 1
    %s732 = scalar_lea.sflag [#allocation3], 1
    %733 = vsyncpa %s732, 1
    %734 = vsyncpa [#allocation6], 1
    %735 = vsyncpa [#allocation4], 1
    %s736 = scalar_lea.sflag [#allocation4], 1
    %737 = vsyncpa %s736, 1

</llo_original>
